<compile_context>
chip_gen: v6e
topology: v6e:2x2x1
jax: 0.10.0
libtpu: 0.0.40
codegen_flags: <defaults>
</compile_context>

<pallas_src>
from functools import lru_cache

import jax
import jax.numpy as jnp
from jax import lax
from jax.experimental import pallas as pl
from jax.experimental.pallas import tpu as pltpu

MAX_TILE_N = 1024   # 256-aligned upper bound on the N tile (full v6e/v7x MXU width)
MAX_TILE_B = 256    # batch tile upper bound (multiple of 8)

# Levels whose padded bf16 basis is smaller than this are left to plain XLA
# (per-pallas_call launch overhead dominates sub-MiB matmuls). Kept at 0 here
# so the small demo below exercises the Pallas kernel; raise to ~1<<20 in prod.
XLA_FALLBACK_BASIS_BYTES = 0


def _round_up(x, m):
    return ((x + m - 1) // m) * m


def _pad_cols(x, n_pad):
    n = x.shape[-1]
    if n == n_pad:
        return x
    return jnp.pad(x, ((0, 0), (0, n_pad - n)))


@lru_cache(maxsize=None)
def _vmem_capacity_bytes():
    try:
        return int(pltpu.get_tpu_info().vmem_capacity_bytes)
    except Exception:
        return 64 * 1024 * 1024   # conservative per-core fallback (v7x)


def _tile_n_candidates(n_pad, max_tile):
    start = min(max_tile, n_pad)
    cands = [t for t in range(start, 0, -256) if n_pad % t == 0]
    return cands or [256]


def _choose_tiles(B, M, n_pad, budget_bytes, w_bytes, out_bytes):
    """Largest (tile_b, tile_n) whose double-buffered working set fits `budget_bytes`."""
    tile_b = B if B <= MAX_TILE_B else MAX_TILE_B

    def need(tb, tn):
        # double-buffered weights / basis / mean / output tiles
        return 2 * (tb * M * w_bytes + M * tn * 2 + tn * 4 + tb * tn * out_bytes)

    cands = _tile_n_candidates(n_pad, MAX_TILE_N)
    tile_n = cands[0]
    for tn in cands:                         # shrink the N tile first...
        tile_n = tn
        if need(tile_b, tn) <= budget_bytes:
            break
    while need(tile_b, tile_n) > budget_bytes and tile_b > 8:   # ...then the B tile
        tile_b = max(8, _round_up(tile_b // 2, 8))
    # TODO(synk): for very large M (thousands of modes) add an "arbitrary"
    # K-reduction grid axis with a VMEM f32 accumulator instead of full-M blocks.
    return tile_b, tile_n


def _pca_decode_kernel(w_ref, basis_ref, mean_ref, o_ref):
    # w_ref:     (TB, M)   bf16 weights tile (inner / batch grid axis)
    # basis_ref: (M, TN)   bf16 sigma-scaled components tile (outer / N grid
    #                      axis; block index is constant across the inner loop
    #                      so it is DMA'd from HBM exactly once per N tile)
    # mean_ref:  (1, TN)   f32 mean tile (broadcast over batch)
    # o_ref:     (TB, TN)  output tile
    acc = jnp.dot(w_ref[...], basis_ref[...],           # native bf16 MXU path
                  preferred_element_type=jnp.float32)
    o_ref[...] = (acc + mean_ref[...]).astype(o_ref.dtype)


def pca_decode(weights, basis, mean, *, out_dtype=jnp.float32):
    """out = weights @ basis + mean  (hot path in Pallas).

    weights: (B, M)      float32 (cast to bf16 for the MXU here)
    basis:   (M, N_pad)  bfloat16, N_pad a multiple of 256
    mean:    (1, N_pad)  float32
    returns: (B, N_pad)  out_dtype (f32 default; bf16 halves the write stream
                         when downstream tolerates it)
    """
    B, M = weights.shape
    M2, n_pad = basis.shape
    assert M == M2, (M, M2)
    assert n_pad % 256 == 0, n_pad
    assert mean.shape == (1, n_pad), mean.shape

    cap = _vmem_capacity_bytes()
    w_bytes = 2                                  # bf16 weights fed to the MXU
    out_bytes = jnp.dtype(out_dtype).itemsize
    tile_b, tile_n = _choose_tiles(B, M, n_pad, int(cap * 0.6), w_bytes, out_bytes)

    n_tiles_n = n_pad // tile_n
    n_tiles_b = pl.cdiv(B, tile_b)
    # N outer / B inner: the bf16 basis (dominant HBM stream) is read once;
    # only the tiny (B, M) weights are re-fetched per N tile. Both axes are
    # "parallel" so the megacore split engages when either has >= 2 blocks.
    grid = (n_tiles_n, n_tiles_b)

    vmem_need = 2 * (tile_b * M * w_bytes + M * tile_n * 2 + tile_n * 4
                     + tile_b * tile_n * out_bytes)
    vmem_limit = min(int(vmem_need * 1.25) + 4 * 1024 * 1024, int(cap * 0.8))

    cost = pl.CostEstimate(
        flops=2 * B * M * n_pad,
        transcendentals=0,
        bytes_accessed=(M * n_pad * 2                 # basis streamed from HBM once
                        + n_tiles_n * B * M * w_bytes  # small weights re-read per N tile
                        + n_pad * 4                    # mean read once
                        + B * n_pad * out_bytes),      # output write
    )

    return pl.pallas_call(
        _pca_decode_kernel,
        out_shape=jax.ShapeDtypeStruct((B, n_pad), out_dtype),
        grid_spec=pltpu.PrefetchScalarGridSpec(
            num_scalar_prefetch=0,
            grid=grid,
            in_specs=[
                pl.BlockSpec((tile_b, M), lambda j, i: (i, 0)),   # weights: inner B axis
                pl.BlockSpec((M, tile_n), lambda j, i: (0, j)),   # basis: outer N axis
                pl.BlockSpec((1, tile_n), lambda j, i: (0, j)),   # mean: outer N axis
            ],
            out_specs=pl.BlockSpec((tile_b, tile_n), lambda j, i: (i, j)),
        ),
        compiler_params=pltpu.CompilerParams(
            dimension_semantics=("parallel", "parallel"),
            vmem_limit_bytes=vmem_limit,
        ),
        cost_estimate=cost,
    )(weights.astype(jnp.bfloat16), basis, mean)
    # TODO(synk): if bf16 weights precision is ever insufficient, split weights
    # into two bf16 planes (bf16x2) rather than widening the basis to f32.


class PCA:
    """Per-level PCA fit (plain-JAX glue at init) + Pallas-kernel decode."""

    def __init__(self, data):
        k = data.shape[0]
        flat = jnp.asarray(data, jnp.float32).reshape(k, -1)   # flatten(start_dim=1)
        self.n_features = flat.shape[1]
        self.mean = jnp.mean(flat, axis=0)                     # (N,) f32
        centered = flat - self.mean
        _, s, vt = jnp.linalg.svd(centered, full_matrices=False)
        sigma = s / jnp.sqrt(jnp.maximum(k - 1, 1))            # (M,)
        basis = sigma[:, None] * vt                            # (M, N) f32
        self.num_modes = basis.shape[0]

        # Kernel layout: bf16 basis halves the dominant HBM stream; feature
        # axis padded to a multiple of 256 only (tile_n chosen per call).
        n_pad = _round_up(self.n_features, 256)
        self._basis = _pad_cols(basis, n_pad).astype(jnp.bfloat16)   # (M, n_pad) bf16
        self._mean_pad = _pad_cols(self.mean[None, :], n_pad)        # (1, n_pad) f32
        self._basis_bytes = self._basis.size * 2

    def __len__(self):
        return self.num_modes

    def basis_f32(self, num_modes=None):
        m = self.num_modes if num_modes is None else num_modes
        return self._basis[:m, : self.n_features].astype(jnp.float32)

    def __call__(self, weights, num_modes=None):
        m = self.num_modes if num_modes is None else num_modes
        w = jnp.asarray(weights, jnp.float32)[:, :m]
        if self._basis_bytes < XLA_FALLBACK_BASIS_BYTES:
            # Tiny levels: launch overhead dominates; let XLA handle the matmul.
            return jnp.dot(w, self.basis_f32(m)) + self.mean
        out = pca_decode(w, self._basis[:m], self._mean_pad)
        return out[:, : self.n_features]


class LatentDist:
    """Plain-JAX port of the flatten/unflatten glue."""

    def flatten(self, data):
        self.shape = [level.shape for level in data]
        return jnp.concatenate(
            [level.reshape(level.shape[0], -1) for level in data], axis=1
        )

    def unflatten(self, data, n_samples=None):
        i = 0
        latent = []
        for shape in self.shape:
            if n_samples:
                shape = (n_samples,) + tuple(shape[1:])
            length = shape[-1] ** 3 * shape[1]
            latent.append(data[:, i:i + length].reshape(shape))
            i += length
        return latent

    def sample_list(self, data):
        unflattened = []
        for i in range(data[0].shape[0]):
            unflattened.append([lod[i][None] for lod in data])
        return unflattened

    def project_data(self, data):
        return data


class LoDPCA(LatentDist):
    """JAX port of deformer.latents.LoDPCA: one PCA per LoD level."""

    def __init__(self, data):
        super().__init__()
        self.pcas = [PCA(level) for level in data]

    def __len__(self):
        return len(self.pcas[-1])

    def forward(self, weights, num_modes=None):
        # TODO(synk): many tiny levels could be fused into one pallas_call by
        # scalar-prefetching per-level N offsets into the index_map.
        return [pca(w, num_modes) for w, pca in zip(weights, self.pcas)]

    def __call__(self, weights, num_modes=None):
        return self.forward(weights, num_modes)

    # TODO(synk): project_data / generate_random_samples / get_weights depend on
    # PCA helper methods (project_data, generate_random_samples, get_weigths)
    # not provided in the spec; only the decode (forward) path is implemented.


if __name__ == "__main__":
    key = jax.random.PRNGKey(0)
    k_examples, C, D = 6, 2, 8            # two LoD levels of NCDHW grid latents
    kd0, kd1, kw0, kw1 = jax.random.split(key, 4)
    level0 = jax.random.normal(kd0, (k_examples, C, D, D, D), jnp.float32)
    level1 = jax.random.normal(kd1, (k_examples, C, D, D, D), jnp.float32)
    # per-level flattened latent dim N = 2 * 8^3 = 1024 (already 256-aligned)

    model = LoDPCA([level0, level1])

    batch = 2
    weights = [
        jax.random.normal(kw0, (batch, len(model.pcas[0])), jnp.float32),
        jax.random.normal(kw1, (batch, len(model.pcas[1])), jnp.float32),
    ]

    outs = model.forward(weights)          # list of (batch, 1024) via Pallas kernels
    outs = jax.block_until_ready(outs)

    # pure-JAX reference on the same bf16-quantized operands the kernel sees
    for w, pca, out in zip(weights, model.pcas, outs):
        w_q = w.astype(jnp.bfloat16).astype(jnp.float32)
        ref = jnp.dot(w_q, pca.basis_f32(),
                      precision=lax.Precision.HIGHEST) + pca.mean
        assert out.shape == ref.shape, (out.shape, ref.shape)
        err = float(jnp.abs(out - ref).max())
        assert jnp.allclose(out, ref, atol=1e-2, rtol=1e-2), err

    print("KERNEL_OK")
</pallas_src>

<mosaic_0001>
module attributes {stable_mosaic.version = 11 : i64} {
  func.func @_pca_decode_kernel(%arg0: i32, %arg1: i32, %arg2: memref<2x6xbf16, #tpu.memory_space<vmem>>, %arg3: memref<6x1024xbf16, #tpu.memory_space<vmem>>, %arg4: memref<1x1024xf32, #tpu.memory_space<vmem>>, %arg5: memref<2x1024xf32, #tpu.memory_space<vmem>>) attributes {dimension_semantics = [#tpu.dimension_semantics<parallel>, #tpu.dimension_semantics<parallel>], iteration_bounds = array<i64: 1, 1>, scalar_prefetch = 0 : i64, scratch_operands = 0 : i64, tpu.core_type = #tpu.core_type<tc>, window_params = [{transform_indices = @transform_0, window_bounds = array<i64: 2, 6>}, {transform_indices = @transform_1, window_bounds = array<i64: 6, 1024>}, {transform_indices = @transform_2, window_bounds = array<i64: 1, 1024>}, {transform_indices = @transform_3, window_bounds = array<i64: 2, 1024>}]} {
    %c0 = arith.constant 0 : index
    %c0_0 = arith.constant 0 : index
    %0 = vector.load %arg2[%c0, %c0_0] : memref<2x6xbf16, #tpu.memory_space<vmem>>, vector<2x6xbf16>
    %c0_1 = arith.constant 0 : index
    %c0_2 = arith.constant 0 : index
    %1 = vector.load %arg3[%c0_1, %c0_2] : memref<6x1024xbf16, #tpu.memory_space<vmem>>, vector<6x1024xbf16>
    %cst = arith.constant dense<0.000000e+00> : vector<2x1024xf32>
    %2 = tpu.matmul %0, %1, %cst {dimension_numbers = #tpu.dot_dimension_numbers<[1], [0], [0], [1], [0, 0, 1, 1], [], []>} : vector<2x6xbf16>, vector<6x1024xbf16>, vector<2x1024xf32> -> vector<2x1024xf32>
    %c0_3 = arith.constant 0 : index
    %c0_4 = arith.constant 0 : index
    %3 = vector.load %arg4[%c0_3, %c0_4] : memref<1x1024xf32, #tpu.memory_space<vmem>>, vector<1x1024xf32>
    %4 = vector.broadcast %3 : vector<1x1024xf32> to vector<2x1024xf32>
    %5 = arith.addf %2, %4 : vector<2x1024xf32>
    %c0_5 = arith.constant 0 : index
    %c0_6 = arith.constant 0 : index
    %6 = vector.load %arg5[%c0_5, %c0_6] : memref<2x1024xf32, #tpu.memory_space<vmem>>, vector<2x1024xf32>
    tpu.vector_store %arg5[%c0_5, %c0_6], %5 {strides = array<i32>} : memref<2x1024xf32, #tpu.memory_space<vmem>>, vector<2x1024xf32>,
    return
  }
  func.func @transform_0(%arg0: i32, %arg1: i32) -> (i32, i32) {
    %c0_i32 = arith.constant 0 : i32
    %c0_i32_0 = arith.constant 0 : i32
    return %arg1, %c0_i32 : i32, i32
  }
  func.func @transform_1(%arg0: i32, %arg1: i32) -> (i32, i32) {
    %c0_i32 = arith.constant 0 : i32
    %c0_i32_0 = arith.constant 0 : i32
    return %c0_i32, %arg0 : i32, i32
  }
  func.func @transform_2(%arg0: i32, %arg1: i32) -> (i32, i32) {
    %c0_i32 = arith.constant 0 : i32
    %c0_i32_0 = arith.constant 0 : i32
    return %c0_i32, %arg0 : i32, i32
  }
  func.func @transform_3(%arg0: i32, %arg1: i32) -> (i32, i32) {
    %c0_i32 = arith.constant 0 : i32
    return %arg1, %arg0 : i32, i32
  }
}

</mosaic_0001>

<llo_original>
// kernel: tpu_custom_call.1
$region0: #{tpu_custom_call.1}
  #allocation0 [shape = 'u32[]', space=smem, size = 0x4, offset = 0x4, fixed_abs, tag = 'smem constant byte address 0x4 - core index']
  #allocation1 [shape = 'u32[144,128]{1,0:T(1,128)}', space=vmem, size = 0x12000, scoped, tag = 'internal scratch']
  %s0 = inlined_call_operand.hbm [shape: bf16[2,6], index: 0, kind: input, shape index: {}]
  %s1 = inlined_call_operand.hbm [shape: bf16[6,1024], index: 1, kind: input, shape index: {}]
  %s2 = inlined_call_operand.hbm [shape: f32[1,1024], index: 2, kind: input, shape index: {}]
  %s3 = inlined_call_operand.hbm [shape: f32[2,1024], index: 3, kind: output, shape index: {}]
  %s4 = sld [smem:[#allocation0]]
  $region34: #{tpu_custom_call.1} parent=0
    _
  %s6 = ssub.s32 1, %s4
  %s7 = scalar_select 0, %s6, %s4
  $region1: #{tpu_custom_call.1} parent=0
    #allocation2 [shape = 'u8[512]{0}', space=vmem, size = 0x400, scoped, tag = 'input window, operand 0, single buffered']
    #allocation3 [shape = 's32[1]{0}', space=sflag, size = 0x4, scoped, tag = 'scoped memory for tpu_custom_call.1']
    #allocation4 [shape = 's32[1]{0}', space=sflag, size = 0x4, scoped, tag = 'scoped memory for tpu_custom_call.1']
    #allocation5 [shape = 'u8[16384]{0}', space=vmem, size = 0x4000, scoped, tag = 'input window, operand 1, single buffered']
    #allocation6 [shape = 's32[1]{0}', space=sflag, size = 0x4, scoped, tag = 'scoped memory for tpu_custom_call.1']
    #allocation7 [shape = 'u8[4096]{0}', space=vmem, size = 0x1000, scoped, tag = 'input window, operand 2, single buffered']
    #allocation8 [shape = 'u8[8192]{0}', space=vmem, size = 0x2000, scoped, tag = 'output window, operand 0, single buffered']
    %8 = vsyncpa [#allocation3], 0
    %9 = vsyncpa [#allocation6], 0
    %10 = vsyncpa [#allocation4], 0
    // Predicated region
    $region2: #{tpu_custom_call.1} parent=1 // pred_check
      _
    $region3: #{tpu_custom_call.1} parent=1 // pred_check_branch
      %12 = sbr.rel (0) target = $region5
    $region4: #{tpu_custom_call.1} parent=1 // pred_region
      %s14 = ssub.s32 16, 16
      %15 = vsyncadd [#allocation3], %s14
      %s17 = sshll.u32 [#allocation2], 4
      %s18 = int_to_ptr.vmem [resolvable:$true] %s17
      %20 = dma.hbm_to_vmem [thread:$0]  %s0, 16, %s18, [#allocation3]
    $region5: #{tpu_custom_call.1} parent=1 // pred_fallthru
      _
    // Predicated region
    $region6: #{tpu_custom_call.1} parent=1 // pred_check
      _
    $region7: #{tpu_custom_call.1} parent=1 // pred_check_branch
      %22 = sbr.rel (0) target = $region9
    $region8: #{tpu_custom_call.1} parent=1 // pred_region
      %s24 = ssub.s32 512, 512
      %25 = vsyncadd [#allocation6], %s24
      %s27 = sshll.u32 [#allocation5], 4
      %s28 = int_to_ptr.vmem [resolvable:$true] %s27
      %30 = dma.hbm_to_vmem [thread:$0]  %s1, 512, %s28, [#allocation6]
    $region9: #{tpu_custom_call.1} parent=1 // pred_fallthru
      _
    // Predicated region
    $region10: #{tpu_custom_call.1} parent=1 // pred_check
      _
    $region11: #{tpu_custom_call.1} parent=1 // pred_check_branch
      %32 = sbr.rel (0) target = $region13
    $region12: #{tpu_custom_call.1} parent=1 // pred_region
      %s34 = ssub.s32 128, 128
      %35 = vsyncadd [#allocation6], %s34
      %s37 = sshll.u32 [#allocation7], 4
      %s38 = int_to_ptr.vmem [resolvable:$true] %s37
      %40 = dma.hbm_to_vmem [thread:$0]  %s2, 128, %s38, [#allocation6]
    $region13: #{tpu_custom_call.1} parent=1 // pred_fallthru
      _
    // Predicated region
    $region14: #{tpu_custom_call.1} parent=1 // pred_check
      _
    $region15: #{tpu_custom_call.1} parent=1 // pred_check_branch
      %42 = sbr.rel (0) target = $region17
    $region16: #{tpu_custom_call.1} parent=1 // pred_region
      %43 = dma.done [#allocation3], 16
    $region17: #{tpu_custom_call.1} parent=1 // pred_fallthru
      _
    // Predicated region
    $region18: #{tpu_custom_call.1} parent=1 // pred_check
      _
    $region19: #{tpu_custom_call.1} parent=1 // pred_check_branch
      %45 = sbr.rel (0) target = $region21
    $region20: #{tpu_custom_call.1} parent=1 // pred_region
      %46 = dma.done [#allocation6], 512
    $region21: #{tpu_custom_call.1} parent=1 // pred_fallthru
      _
    // Predicated region
    $region22: #{tpu_custom_call.1} parent=1 // pred_check
      _
    $region23: #{tpu_custom_call.1} parent=1 // pred_check_branch
      %48 = sbr.rel (0) target = $region25
    $region24: #{tpu_custom_call.1} parent=1 // pred_region
      %49 = dma.done [#allocation6], 128
    $region25: #{tpu_custom_call.1} parent=1 // pred_fallthru
      _
    %v51 = vld [vmem:[#allocation2] sm:$0x1]
    %v52 = vld [vmem:[#allocation5] sm:$0x77]
    %v53 = vld [vmem:[#allocation5 + $0x8] sm:$0x77]
    %v54 = vld [vmem:[#allocation5 + $0x10] sm:$0x77]
    %v55 = vld [vmem:[#allocation5 + $0x18] sm:$0x77]
    %v56 = vld [vmem:[#allocation7] sm:$0xff]
    %v58 = vlaneseq
    %v59 = vshrl.u32 %v58, 7
    %v60 = vsub.s32 0, %v59
    %v61 = vrot.slane %v56, %v60
    %v62 = vlaneseq
    %v63 = vshrl.u32 %v62, 7
    %v64 = vsub.s32 1, %v63
    %v65 = vrot.slane %v56, %v64
    %v66 = vlaneseq
    %v67 = vshrl.u32 %v66, 7
    %v68 = vsub.s32 2, %v67
    %v69 = vrot.slane %v56, %v68
    %v70 = vlaneseq
    %v71 = vshrl.u32 %v70, 7
    %v72 = vsub.s32 3, %v71
    %v73 = vrot.slane %v56, %v72
    %v74 = vlaneseq
    %v75 = vshrl.u32 %v74, 7
    %v76 = vsub.s32 4, %v75
    %v77 = vrot.slane %v56, %v76
    %v78 = vlaneseq
    %v79 = vshrl.u32 %v78, 7
    %v80 = vsub.s32 5, %v79
    %v81 = vrot.slane %v56, %v80
    %v82 = vlaneseq
    %v83 = vshrl.u32 %v82, 7
    %v84 = vsub.s32 6, %v83
    %v85 = vrot.slane %v56, %v84
    %v86 = vlaneseq
    %v87 = vshrl.u32 %v86, 7
    %v88 = vsub.s32 7, %v87
    %v89 = vrot.slane %v56, %v88
    %v102 = vunpack.c.l.b16 %v52
    %v103 = vunpack.c.h.b16 %v52
    %v104 = vunpack.c.l.b16 %v53
    %v105 = vunpack.c.h.b16 %v53
    %v106 = vunpack.c.l.b16 %v54
    %v107 = vunpack.c.h.b16 %v54
    %v108 = vunpack.c.l.b16 %v55
    %v109 = vunpack.c.h.b16 %v55
    %v110 = vpack.c.b16 %v102, %v102
    %v111 = vpack.c.b16 %v103, %v103
    %v112 = vpack.c.b16 %v104, %v104
    %v113 = vpack.c.b16 %v105, %v105
    %v114 = vpack.c.b16 %v106, %v106
    %v115 = vpack.c.b16 %v107, %v107
    %v116 = vpack.c.b16 %v108, %v108
    %v117 = vpack.c.b16 %v109, %v109
    %vm118 = vcmask 48128
    %v120 = vsel %vm118, %v51, 0
    %vm122 = vcmask 1042432
    %v124 = vsel %vm122, %v110, 0
    %v127 = vsel %vm122, %v111, 0
    %v130 = vsel %vm122, %v112, 0
    %v133 = vsel %vm122, %v113, 0
    %v136 = vsel %vm122, %v114, 0
    %v139 = vsel %vm122, %v115, 0
    %v142 = vsel %vm122, %v116, 0
    %v145 = vsel %vm122, %v117, 0
    %147 = vmatprep.subr.bf16.mxu0 0
    %148 = vmatpush1.bf16.msra.mxu0 0
    %149 = vmatprep.subr.bf16.mxu0 0
    %150 = vmatpush1.bf16.msra.mxu0 0
    %151 = vmatprep.subr.bf16.mxu0 0
    %152 = vmatpush1.bf16.msra.mxu0 0
    %153 = vmatprep.subr.bf16.mxu0 0
    %154 = vmatpush1.bf16.msra.mxu0 0
    %155 = vmatprep.subr.bf16.mxu0 0
    %156 = vmatpush1.bf16.msra.mxu0 0
    %157 = vmatprep.subr.bf16.mxu0 0
    %158 = vmatpush1.bf16.msra.mxu0 0
    %159 = vmatprep.subr.bf16.mxu0 0
    %160 = vmatpush1.bf16.msra.mxu0 0
    %161 = vmatprep.subr.bf16.mxu0 %v127
    %162 = vmatpush1.bf16.msra.mxu0 %v124
    %163 = vmatprep.subr.bf16.mxu0 0
    %164 = vmatpush2.bf16.msra.mxu0 0
    %165 = vmatprep.subr.bf16.mxu0 0
    %166 = vmatpush2.bf16.msra.mxu0 0
    %167 = vmatprep.subr.bf16.mxu0 0
    %168 = vmatpush2.bf16.msra.mxu0 0
    %169 = vmatprep.subr.bf16.mxu0 0
    %170 = vmatpush2.bf16.msra.mxu0 0
    %171 = vmatprep.subr.bf16.mxu0 0
    %172 = vmatpush2.bf16.msra.mxu0 0
    %173 = vmatprep.subr.bf16.mxu0 0
    %174 = vmatpush2.bf16.msra.mxu0 0
    %175 = vmatprep.subr.bf16.mxu0 0
    %176 = vmatpush2.bf16.msra.mxu0 0
    %177 = vmatprep.subr.bf16.mxu0 0
    %178 = vmatpush2.bf16.msra.mxu0 0
    %179 = vmatprep.mubr.bf16.mxu0 0
    %180 = vmatmul.mubr.bf16.gmra.mxu0 %v120
    %v181 = vpop.f32.mrf.mxu0
    %v182 = vadd.f32 %v61, %v181
    %v183 = vpop.f32.mrf.mxu0
    %v184 = vadd.f32 %v65, %v183
    %v185 = vpop.f32.mrf.mxu0
    %v186 = vpop.f32.mrf.mxu0
    %187 = vdwg.mxu0
    %188 = vmatprep.subr.bf16.mxu0 0
    %189 = vmatpush1.bf16.msra.mxu0 0
    %190 = vmatprep.subr.bf16.mxu0 0
    %191 = vmatpush1.bf16.msra.mxu0 0
    %192 = vmatprep.subr.bf16.mxu0 0
    %193 = vmatpush1.bf16.msra.mxu0 0
    %194 = vmatprep.subr.bf16.mxu0 0
    %195 = vmatpush1.bf16.msra.mxu0 0
    %196 = vmatprep.subr.bf16.mxu0 0
    %197 = vmatpush1.bf16.msra.mxu0 0
    %198 = vmatprep.subr.bf16.mxu0 0
    %199 = vmatpush1.bf16.msra.mxu0 0
    %200 = vmatprep.subr.bf16.mxu0 0
    %201 = vmatpush1.bf16.msra.mxu0 0
    %202 = vmatprep.subr.bf16.mxu0 %v133
    %203 = vmatpush1.bf16.msra.mxu0 %v130
    %204 = vmatprep.subr.bf16.mxu0 0
    %205 = vmatpush2.bf16.msra.mxu0 0
    %206 = vmatprep.subr.bf16.mxu0 0
    %207 = vmatpush2.bf16.msra.mxu0 0
    %208 = vmatprep.subr.bf16.mxu0 0
    %209 = vmatpush2.bf16.msra.mxu0 0
    %210 = vmatprep.subr.bf16.mxu0 0
    %211 = vmatpush2.bf16.msra.mxu0 0
    %212 = vmatprep.subr.bf16.mxu0 0
    %213 = vmatpush2.bf16.msra.mxu0 0
    %214 = vmatprep.subr.bf16.mxu0 0
    %215 = vmatpush2.bf16.msra.mxu0 0
    %216 = vmatprep.subr.bf16.mxu0 0
    %217 = vmatpush2.bf16.msra.mxu0 0
    %218 = vmatprep.subr.bf16.mxu0 0
    %219 = vmatpush2.bf16.msra.mxu0 0
    %220 = vmatprep.mubr.bf16.mxu0 0
    %221 = vmatmul.mubr.bf16.gmra.mxu0 %v120
    %v222 = vpop.f32.mrf.mxu0
    %v223 = vadd.f32 %v69, %v222
    %v224 = vpop.f32.mrf.mxu0
    %v225 = vadd.f32 %v73, %v224
    %v226 = vpop.f32.mrf.mxu0
    %v227 = vpop.f32.mrf.mxu0
    %228 = vdwg.mxu0
    %229 = vmatprep.subr.bf16.mxu0 0
    %230 = vmatpush1.bf16.msra.mxu0 0
    %231 = vmatprep.subr.bf16.mxu0 0
    %232 = vmatpush1.bf16.msra.mxu0 0
    %233 = vmatprep.subr.bf16.mxu0 0
    %234 = vmatpush1.bf16.msra.mxu0 0
    %235 = vmatprep.subr.bf16.mxu0 0
    %236 = vmatpush1.bf16.msra.mxu0 0
    %237 = vmatprep.subr.bf16.mxu0 0
    %238 = vmatpush1.bf16.msra.mxu0 0
    %239 = vmatprep.subr.bf16.mxu0 0
    %240 = vmatpush1.bf16.msra.mxu0 0
    %241 = vmatprep.subr.bf16.mxu0 0
    %242 = vmatpush1.bf16.msra.mxu0 0
    %243 = vmatprep.subr.bf16.mxu0 %v139
    %244 = vmatpush1.bf16.msra.mxu0 %v136
    %245 = vmatprep.subr.bf16.mxu0 0
    %246 = vmatpush2.bf16.msra.mxu0 0
    %247 = vmatprep.subr.bf16.mxu0 0
    %248 = vmatpush2.bf16.msra.mxu0 0
    %249 = vmatprep.subr.bf16.mxu0 0
    %250 = vmatpush2.bf16.msra.mxu0 0
    %251 = vmatprep.subr.bf16.mxu0 0
    %252 = vmatpush2.bf16.msra.mxu0 0
    %253 = vmatprep.subr.bf16.mxu0 0
    %254 = vmatpush2.bf16.msra.mxu0 0
    %255 = vmatprep.subr.bf16.mxu0 0
    %256 = vmatpush2.bf16.msra.mxu0 0
    %257 = vmatprep.subr.bf16.mxu0 0
    %258 = vmatpush2.bf16.msra.mxu0 0
    %259 = vmatprep.subr.bf16.mxu0 0
    %260 = vmatpush2.bf16.msra.mxu0 0
    %261 = vmatprep.mubr.bf16.mxu0 0
    %262 = vmatmul.mubr.bf16.gmra.mxu0 %v120
    %v263 = vpop.f32.mrf.mxu0
    %v264 = vadd.f32 %v77, %v263
    %v265 = vpop.f32.mrf.mxu0
    %v266 = vadd.f32 %v81, %v265
    %v267 = vpop.f32.mrf.mxu0
    %v268 = vpop.f32.mrf.mxu0
    %269 = vdwg.mxu0
    %270 = vmatprep.subr.bf16.mxu0 0
    %271 = vmatpush1.bf16.msra.mxu0 0
    %272 = vmatprep.subr.bf16.mxu0 0
    %273 = vmatpush1.bf16.msra.mxu0 0
    %274 = vmatprep.subr.bf16.mxu0 0
    %275 = vmatpush1.bf16.msra.mxu0 0
    %276 = vmatprep.subr.bf16.mxu0 0
    %277 = vmatpush1.bf16.msra.mxu0 0
    %278 = vmatprep.subr.bf16.mxu0 0
    %279 = vmatpush1.bf16.msra.mxu0 0
    %280 = vmatprep.subr.bf16.mxu0 0
    %281 = vmatpush1.bf16.msra.mxu0 0
    %282 = vmatprep.subr.bf16.mxu0 0
    %283 = vmatpush1.bf16.msra.mxu0 0
    %284 = vmatprep.subr.bf16.mxu0 %v145
    %285 = vmatpush1.bf16.msra.mxu0 %v142
    %286 = vmatprep.subr.bf16.mxu0 0
    %287 = vmatpush2.bf16.msra.mxu0 0
    %288 = vmatprep.subr.bf16.mxu0 0
    %289 = vmatpush2.bf16.msra.mxu0 0
    %290 = vmatprep.subr.bf16.mxu0 0
    %291 = vmatpush2.bf16.msra.mxu0 0
    %292 = vmatprep.subr.bf16.mxu0 0
    %293 = vmatpush2.bf16.msra.mxu0 0
    %294 = vmatprep.subr.bf16.mxu0 0
    %295 = vmatpush2.bf16.msra.mxu0 0
    %296 = vmatprep.subr.bf16.mxu0 0
    %297 = vmatpush2.bf16.msra.mxu0 0
    %298 = vmatprep.subr.bf16.mxu0 0
    %299 = vmatpush2.bf16.msra.mxu0 0
    %300 = vmatprep.subr.bf16.mxu0 0
    %301 = vmatpush2.bf16.msra.mxu0 0
    %302 = vmatprep.mubr.bf16.mxu0 0
    %303 = vmatmul.mubr.bf16.gmra.mxu0 %v120
    %v304 = vpop.f32.mrf.mxu0
    %v305 = vadd.f32 %v85, %v304
    %v306 = vpop.f32.mrf.mxu0
    %v307 = vadd.f32 %v89, %v306
    %v308 = vpop.f32.mrf.mxu0
    %v309 = vpop.f32.mrf.mxu0
    %310 = vdwg.mxu0
    %v319 = vcombine.low %v182, %v184
    %v320 = vcombine.low %v223, %v225
    %v322 = vunpack.c.l.s4 1983009808
    %v323 = vunpack.c.0.s8 %v322
    %v324 = vlaneseq
    %v325 = vshrl.u32 %v324, 7
    %v326 = vsub.s32 %v323, %v325
    %v327 = vrot.slane %v319, %v326
    %v329 = vunpack.c.l.s4 1983009808
    %v330 = vunpack.c.0.s8 %v329
    %v331 = vlaneseq
    %v332 = vshrl.u32 %v331, 7
    %v333 = vsub.s32 %v330, %v332
    %v334 = vrot.slane %v320, %v333
    %v335 = vcombine.low %v327, %v334
    %v336 = vcombine.low %v264, %v266
    %v337 = vcombine.low %v305, %v307
    %v339 = vunpack.c.l.s4 1983009808
    %v340 = vunpack.c.0.s8 %v339
    %v341 = vlaneseq
    %v342 = vshrl.u32 %v341, 7
    %v343 = vsub.s32 %v340, %v342
    %v344 = vrot.slane %v336, %v343
    %v346 = vunpack.c.l.s4 1983009808
    %v347 = vunpack.c.0.s8 %v346
    %v348 = vlaneseq
    %v349 = vshrl.u32 %v348, 7
    %v350 = vsub.s32 %v347, %v349
    %v351 = vrot.slane %v337, %v350
    %v352 = vcombine.low %v344, %v351
    %355 = vst [vmem:[#allocation8] sm:$0xff] %v335
    %356 = vst [vmem:[#allocation8 + $0x8] sm:$0xff] %v352
    // Predicated region
    $region26: #{tpu_custom_call.1} parent=1 // pred_check
      _
    $region27: #{tpu_custom_call.1} parent=1 // pred_check_branch
      %358 = sbr.rel (0) target = $region29
    $region28: #{tpu_custom_call.1} parent=1 // pred_region
      %s360 = ssub.s32 256, 256
      %361 = vsyncadd [#allocation4], %s360
      %s363 = sshll.u32 [#allocation8], 4
      %s364 = int_to_ptr.vmem [resolvable:$true] %s363
      %366 = dma.vmem_to_hbm [thread:$0]  %s364, 256, %s3, [#allocation4]
    $region29: #{tpu_custom_call.1} parent=1 // pred_fallthru
      _
    // Predicated region
    $region30: #{tpu_custom_call.1} parent=1 // pred_check
      _
    $region31: #{tpu_custom_call.1} parent=1 // pred_check_branch
      %368 = sbr.rel (0) target = $region33
    $region32: #{tpu_custom_call.1} parent=1 // pred_region
      %369 = dma.done [#allocation4], 256
    $region33: #{tpu_custom_call.1} parent=1 // pred_fallthru
      _
    %370 = vsyncpa [#allocation3], 1
    %371 = vsyncpa [#allocation6], 1
    %372 = vsyncpa [#allocation4], 1

</llo_original>
